<compile_context>
chip_gen: v6e
topology: v6e:2x2x1
jax: 0.10.0
libtpu: 0.0.40
codegen_flags: <defaults>
</compile_context>

<pallas_src>
import numpy as np

import jax
import jax.numpy as jnp
from jax.experimental import pallas as pl
from jax.experimental.pallas import tpu as pltpu


def _cnn_conv_pool_kernel(emb_ref, wconv_ref, bconv_ref, mask_ref, out_ref):
    """Per-batch-tile: im2col (in VMEM) -> packed conv matmul -> bias/ReLU ->
    position mask -> max-pool over sequence.  Emits lane-dense pooled features."""
    Bt, Lp, D = emb_ref.shape
    L, NFp = mask_ref.shape
    fs_max = Lp - L + 1
    K = wconv_ref.shape[0]                               # = fs_max * D (128)

    # In-VMEM im2col: window tap j contributes emb[:, t+j, :] to lanes [j*D,(j+1)*D).
    # Static ref slices + one lane-concat; the 4x-wide windows never touch HBM.
    x = jnp.concatenate([emb_ref[:, j:j + L, :] for j in range(fs_max)], axis=-1)
    x = x.reshape(Bt * L, K)                             # bf16, lane-dense K=128

    # One fused MXU matmul for every tap of every filter size (f32 accumulate).
    conv = jnp.dot(x, wconv_ref[...], preferred_element_type=jnp.float32)
    conv = jnp.maximum(conv + bconv_ref[...], 0.0)       # bias + ReLU, f32 VPU
    # conv >= 0, so multiplying invalid positions (past each filter size's valid
    # range) and padded lanes by the baked 0/1 mask is equivalent to -inf masking.
    conv = conv.reshape(Bt, L, NFp) * mask_ref[...][None]
    out_ref[...] = jnp.max(conv, axis=1)                 # [Bt, NFp] f32, lane-dense


def init_params(key, vocab_size, embedding_dim, n_filters, filter_sizes,
                output_dim, pad_idx):
    keys = jax.random.split(key, 2 + 2 * len(filter_sizes) + 2)
    emb = jax.random.normal(keys[0], (vocab_size, embedding_dim), jnp.float32) * 0.1
    emb = emb.at[pad_idx].set(0.0)                       # padding_idx row is zero
    conv_w, conv_b = [], []
    for i, fs in enumerate(filter_sizes):
        conv_w.append(jax.random.normal(
            keys[1 + 2 * i], (n_filters, 1, fs, embedding_dim), jnp.float32) * 0.1)
        conv_b.append(jax.random.normal(
            keys[2 + 2 * i], (n_filters,), jnp.float32) * 0.1)
    fc_w = jax.random.normal(
        keys[-2], (output_dim, len(filter_sizes) * n_filters), jnp.float32) * 0.1
    fc_b = jax.random.normal(keys[-1], (output_dim,), jnp.float32) * 0.1
    return {"embedding": emb, "conv_w": conv_w, "conv_b": conv_b,
            "fc_w": fc_w, "fc_b": fc_b}


def cnn_forward(x_ids, params, filter_sizes, *, batch_tile=512):
    """x_ids: [seq_len, batch] int32 token ids (PyTorch convention)."""
    filter_sizes = tuple(int(fs) for fs in filter_sizes)
    ids = x_ids.T                                        # permute(1, 0) -> [B, L]
    # TODO(synk): the embedding gather could be fused into the kernel via
    # PrefetchScalarGridSpec (ids in SMEM, table in pl.ANY or resident VMEM) to
    # save one HBM round trip of the activation stream.
    emb = params["embedding"][ids]                       # [B, L, D] gather (glue)
    B, L, D = emb.shape
    F = params["conv_b"][0].shape[0]
    fs_max = max(filter_sizes)
    Lp = L + fs_max - 1
    K = fs_max * D                                       # 128 -> full MXU depth
    NF = len(filter_sizes) * F
    NFp = int(np.ceil(max(NF, 128) / 128)) * 128         # lane-dense conv/pool width

    # Raw (not im2col'd) activation stream over HBM; windows are built in VMEM.
    emb = jnp.pad(emb, ((0, 0), (0, fs_max - 1), (0, 0))).astype(jnp.bfloat16)

    # --- batch tiling: VMEM-budgeted, multiple of 8, >= 2 grid steps when B allows.
    row_bytes = (2 * (Lp * D * 2 + NFp * 4)              # double-buffered in/out rows
                 + L * K * 2 + L * NFp * 4)              # im2col bf16 + conv f32 rows
    budget = 20 << 20                                    # conservative for v7x 64 MiB VMEM
    cap = max(8, (budget // row_bytes) // 8 * 8)
    batch_tile = max(8, (int(batch_tile) // 8) * 8)
    batch_tile = min(batch_tile, cap)
    if B <= batch_tile:                                  # split into >= 2 tiles of >= 8 rows
        half = -(-B // 2)
        batch_tile = max(8, ((half + 7) // 8) * 8)
    Bp = int(np.ceil(B / batch_tile)) * batch_tile       # pad batch, never collapse grid
    if Bp > B:
        emb = jnp.pad(emb, ((0, Bp - B), (0, 0), (0, 0)))
    grid = (Bp // batch_tile,)

    # --- pack every filter size's conv weight into one K-padded, lane-padded RHS.
    wcols = []
    for i, fs in enumerate(filter_sizes):
        wf = params["conv_w"][i].reshape(F, fs * D).T    # [fs*D, F], tap-major
        wcols.append(jnp.pad(wf, ((0, K - fs * D), (0, 0))))
    wconv = jnp.pad(jnp.concatenate(wcols, axis=1), ((0, 0), (0, NFp - NF)))
    wconv = wconv.astype(jnp.bfloat16)                                  # [K, NFp]
    bconv = jnp.concatenate([params["conv_b"][i] for i in range(len(filter_sizes))])
    bconv = jnp.pad(bconv, (0, NFp - NF)).reshape(1, NFp).astype(jnp.float32)

    # Baked 0/1 validity mask (compile-time constant, passed as an input so the
    # kernel captures no array constants).  Padded lanes stay 0.
    mask_np = np.zeros((L, NFp), np.float32)
    for i, fs in enumerate(filter_sizes):
        mask_np[: L - fs + 1, i * F:(i + 1) * F] = 1.0
    mask = jnp.asarray(mask_np)

    # --- compiler params: parallel batch axis; raise scoped VMEM only if needed.
    est_vmem = (2 * batch_tile * (Lp * D * 2 + NFp * 4)
                + batch_tile * L * (K * 2 + NFp * 4)
                + K * NFp * 2 + NFp * 4 + L * NFp * 4)
    vmem_limit = None
    if est_vmem > (30 << 20):
        vmem_limit = min(int(est_vmem * 3 // 2), 60 << 20)
    compiler_params = pltpu.CompilerParams(
        dimension_semantics=("parallel",), vmem_limit_bytes=vmem_limit)

    flops = 2 * Bp * L * K * NFp
    bytes_accessed = (emb.size * 2 + wconv.size * 2 + bconv.size * 4
                      + mask.size * 4 + Bp * NFp * 4)

    # TODO(synk): if the embedding DMA is still exposed on v7x, add
    # pipeline_mode=pl.Buffered(3) on the activation BlockSpec (re-check VMEM budget).
    pooled = pl.pallas_call(
        _cnn_conv_pool_kernel,
        out_shape=jax.ShapeDtypeStruct((Bp, NFp), jnp.float32),
        grid=grid,
        in_specs=[
            pl.BlockSpec((batch_tile, Lp, D), lambda i: (i, 0, 0)),  # activation stream
            pl.BlockSpec((K, NFp), lambda i: (0, 0)),                # resident weights
            pl.BlockSpec((1, NFp), lambda i: (0, 0)),                # conv bias
            pl.BlockSpec((L, NFp), lambda i: (0, 0)),                # baked mask
        ],
        out_specs=pl.BlockSpec((batch_tile, NFp), lambda i: (i, 0)),
        compiler_params=compiler_params,
        cost_estimate=pl.CostEstimate(flops=flops, transcendentals=0,
                                      bytes_accessed=bytes_accessed),
    )(emb, wconv, bconv, mask)

    pooled = pooled[:B, :NF]                             # drop batch / lane padding
    # TODO(synk): dropout is identity here (eval mode); training-time masking would
    # use pltpu.prng_seed + pltpu.stateful_bernoulli inside the kernel.
    # Tiny 24->2 FC + bias stays in f32 in the wrapper (no degenerate bf16 MXU call).
    return pooled @ params["fc_w"].T + params["fc_b"]


def reference_forward(x_ids, params, filter_sizes):
    """Pure-f32 JAX port of the PyTorch forward (for verification)."""
    ids = x_ids.T
    emb = params["embedding"][ids]                       # [B, L, D]
    B, L, D = emb.shape
    feats = []
    for i, fs in enumerate(filter_sizes):
        w = params["conv_w"][i]                          # [F, 1, fs, D]
        b = params["conv_b"][i]
        F = w.shape[0]
        L_out = L - fs + 1
        w_flat = w.reshape(F, fs * D)
        rows = []
        for t in range(L_out):
            win = emb[:, t:t + fs, :].reshape(B, fs * D)
            rows.append(win @ w_flat.T + b)
        conv = jnp.stack(rows, axis=1)                   # [B, L_out, F]
        conv = jnp.maximum(conv, 0.0)
        feats.append(jnp.max(conv, axis=1))
    feat = jnp.concatenate(feats, axis=1)
    return feat @ params["fc_w"].T + params["fc_b"]


if __name__ == "__main__":
    vocab_size = 50
    embedding_dim = 32
    n_filters = 8
    filter_sizes = (2, 3, 4)
    output_dim = 2
    pad_idx = 0
    seq_len = 16
    batch = 16                                           # -> 2 grid steps of 8 rows

    key = jax.random.PRNGKey(0)
    k_param, k_ids = jax.random.split(key)
    params = init_params(k_param, vocab_size, embedding_dim, n_filters,
                         filter_sizes, output_dim, pad_idx)
    x_ids = jax.random.randint(k_ids, (seq_len, batch), 0, vocab_size,
                               dtype=jnp.int32)

    out = cnn_forward(x_ids, params, filter_sizes)
    out = jax.block_until_ready(out)

    ref = reference_forward(x_ids, params, filter_sizes)
    assert out.shape == (batch, output_dim)
    # bf16 conv-matmul operands (f32 accumulate), f32 FC -> tight-but-safe tolerance.
    assert jnp.allclose(out, ref, atol=2e-2, rtol=2e-2), \
        float(jnp.max(jnp.abs(out - ref)))

    print("KERNEL_OK")
</pallas_src>

<mosaic_0001>
module attributes {stable_mosaic.version = 11 : i64} {
  func.func @_cnn_conv_pool_kernel(%arg0: i32, %arg1: memref<8x19x32xbf16, #tpu.memory_space<vmem>>, %arg2: memref<128x128xbf16, #tpu.memory_space<vmem>>, %arg3: memref<1x128xf32, #tpu.memory_space<vmem>>, %arg4: memref<16x128xf32, #tpu.memory_space<vmem>>, %arg5: memref<8x128xf32, #tpu.memory_space<vmem>>) attributes {dimension_semantics = [#tpu.dimension_semantics<parallel>], iteration_bounds = array<i64: 2>, scalar_prefetch = 0 : i64, scratch_operands = 0 : i64, tpu.core_type = #tpu.core_type<tc>, window_params = [{transform_indices = @transform_0, window_bounds = array<i64: 8, 19, 32>}, {pipeline_mode = #tpu.pipeline_mode<synchronous>, transform_indices = @transform_1, window_bounds = array<i64: 128, 128>}, {pipeline_mode = #tpu.pipeline_mode<synchronous>, transform_indices = @transform_2, window_bounds = array<i64: 1, 128>}, {pipeline_mode = #tpu.pipeline_mode<synchronous>, transform_indices = @transform_3, window_bounds = array<i64: 16, 128>}, {transform_indices = @transform_4, window_bounds = array<i64: 8, 128>}]} {
    %c0 = arith.constant 0 : index
    %c0_0 = arith.constant 0 : index
    %c0_1 = arith.constant 0 : index
    %0 = vector.load %arg1[%c0, %c0_0, %c0_1] : memref<8x19x32xbf16, #tpu.memory_space<vmem>>, vector<8x16x32xbf16>
    %c0_2 = arith.constant 0 : index
    %c1 = arith.constant 1 : index
    %c0_3 = arith.constant 0 : index
    %1 = vector.load %arg1[%c0_2, %c1, %c0_3] : memref<8x19x32xbf16, #tpu.memory_space<vmem>>, vector<8x16x32xbf16>
    %c0_4 = arith.constant 0 : index
    %c2 = arith.constant 2 : index
    %c0_5 = arith.constant 0 : index
    %2 = vector.load %arg1[%c0_4, %c2, %c0_5] : memref<8x19x32xbf16, #tpu.memory_space<vmem>>, vector<8x16x32xbf16>
    %c0_6 = arith.constant 0 : index
    %c3 = arith.constant 3 : index
    %c0_7 = arith.constant 0 : index
    %3 = vector.load %arg1[%c0_6, %c3, %c0_7] : memref<8x19x32xbf16, #tpu.memory_space<vmem>>, vector<8x16x32xbf16>
    %4 = tpu.concatenate %0, %1, %2, %3 in 2 : vector<8x16x32xbf16>, vector<8x16x32xbf16>, vector<8x16x32xbf16>, vector<8x16x32xbf16> -> vector<8x16x128xbf16>
    %5 = vector.shape_cast %4 : vector<8x16x128xbf16> to vector<128x128xbf16>
    %c0_8 = arith.constant 0 : index
    %c0_9 = arith.constant 0 : index
    %6 = vector.load %arg2[%c0_8, %c0_9] : memref<128x128xbf16, #tpu.memory_space<vmem>>, vector<128x128xbf16>
    %cst = arith.constant dense<0.000000e+00> : vector<128x128xf32>
    %7 = tpu.matmul %5, %6, %cst {dimension_numbers = #tpu.dot_dimension_numbers<[1], [0], [0], [1], [0, 0, 1, 1], [], []>} : vector<128x128xbf16>, vector<128x128xbf16>, vector<128x128xf32> -> vector<128x128xf32>
    %c0_10 = arith.constant 0 : index
    %c0_11 = arith.constant 0 : index
    %8 = vector.load %arg3[%c0_10, %c0_11] : memref<1x128xf32, #tpu.memory_space<vmem>>, vector<1x128xf32>
    %9 = vector.broadcast %8 : vector<1x128xf32> to vector<128x128xf32>
    %10 = arith.addf %7, %9 : vector<128x128xf32>
    %cst_12 = arith.constant 0.000000e+00 : f32
    %11 = vector.broadcast %cst_12 : f32 to vector<128x128xf32>
    %12 = arith.maximumf %10, %11 : vector<128x128xf32>
    %13 = vector.shape_cast %12 : vector<128x128xf32> to vector<8x16x128xf32>
    %c0_13 = arith.constant 0 : index
    %c0_14 = arith.constant 0 : index
    %14 = vector.load %arg4[%c0_13, %c0_14] : memref<16x128xf32, #tpu.memory_space<vmem>>, vector<16x128xf32>
    %15 = vector.shape_cast %14 : vector<16x128xf32> to vector<1x16x128xf32>
    %16 = vector.broadcast %15 : vector<1x16x128xf32> to vector<8x16x128xf32>
    %17 = arith.mulf %13, %16 : vector<8x16x128xf32>
    %cst_15 = arith.constant dense<0xFF800000> : vector<8x128xf32>
    %18 = vector.multi_reduction <maximumf>, %17, %cst_15 [1] : vector<8x16x128xf32> to vector<8x128xf32>
    %c0_16 = arith.constant 0 : index
    %c0_17 = arith.constant 0 : index
    %19 = vector.load %arg5[%c0_16, %c0_17] : memref<8x128xf32, #tpu.memory_space<vmem>>, vector<8x128xf32>
    tpu.vector_store %arg5[%c0_16, %c0_17], %18 {strides = array<i32>} : memref<8x128xf32, #tpu.memory_space<vmem>>, vector<8x128xf32>,
    return
  }
  func.func @transform_0(%arg0: i32) -> (i32, i32, i32) {
    %c0_i32 = arith.constant 0 : i32
    %c0_i32_0 = arith.constant 0 : i32
    %c0_i32_1 = arith.constant 0 : i32
    return %arg0, %c0_i32, %c0_i32_0 : i32, i32, i32
  }
  func.func @transform_1(%arg0: i32) -> (i32, i32) {
    %c0_i32 = arith.constant 0 : i32
    %c0_i32_0 = arith.constant 0 : i32
    %c0_i32_1 = arith.constant 0 : i32
    return %c0_i32, %c0_i32_0 : i32, i32
  }
  func.func @transform_2(%arg0: i32) -> (i32, i32) {
    %c0_i32 = arith.constant 0 : i32
    %c0_i32_0 = arith.constant 0 : i32
    %c0_i32_1 = arith.constant 0 : i32
    return %c0_i32, %c0_i32_0 : i32, i32
  }
  func.func @transform_3(%arg0: i32) -> (i32, i32) {
    %c0_i32 = arith.constant 0 : i32
    %c0_i32_0 = arith.constant 0 : i32
    %c0_i32_1 = arith.constant 0 : i32
    return %c0_i32, %c0_i32_0 : i32, i32
  }
  func.func @transform_4(%arg0: i32) -> (i32, i32) {
    %c0_i32 = arith.constant 0 : i32
    %c0_i32_0 = arith.constant 0 : i32
    return %arg0, %c0_i32 : i32, i32
  }
}

</mosaic_0001>

<llo_original>
// kernel: tpu_custom_call.1
$region0: #{tpu_custom_call.1}
  #allocation0 [shape = 'u32[]', space=smem, size = 0x4, offset = 0x4, fixed_abs, tag = 'smem constant byte address 0x4 - core index']
  #allocation1 [shape = 'u32[144,128]{1,0:T(1,128)}', space=vmem, size = 0x12000, scoped, tag = 'internal scratch']
  %s0 = inlined_call_operand.vmem [shape: bf16[16,19,32], index: 0, kind: input, shape index: {}]
  %s1 = inlined_call_operand.vmem [shape: bf16[128,128], index: 1, kind: input, shape index: {}]
  %s2 = inlined_call_operand.vmem [shape: f32[1,128], index: 2, kind: input, shape index: {}]
  %s3 = inlined_call_operand.vmem [shape: f32[16,128], index: 3, kind: input, shape index: {}]
  %s4 = inlined_call_operand.hbm [shape: f32[16,128], index: 4, kind: output, shape index: {}]
  %s5 = sld [smem:[#allocation0]]
  $region49: #{tpu_custom_call.1} parent=0
    _
  %s7 = ssub.s32 1, %s5
  %s8 = scalar_select 0, %s7, %s5
  $region1: #{tpu_custom_call.1} parent=0
    #allocation2 [shape = 'u8[8192]{0}', space=vmem, size = 0x2000, scoped, tag = 'output window, operand 0']
    #allocation3 [shape = 's32[2]{0}', space=sflag, size = 0x8, scoped, tag = 'scoped memory for tpu_custom_call.1']
    %9 = vsyncpa [#allocation3], 0
    %s10 = scalar_lea.sflag [#allocation3], 1
    %11 = vsyncpa %s10, 0
    loop: start=0, step=1, limit=4
    $region2: #{tpu_custom_call.1} parent=1 // loop_pre_header
      _
    $region3: #{tpu_custom_call.1} parent=1 // loop_header
      %s13 = sphi 0, %s17
      %p14 = scmp.ge.s32.totalorder %s13, 4
      %s23 = sphi 0, %s25
      %s26 = sphi 0, %s23
      %s27 = sphi 0, %s26
      %s43 = sphi 0, %s27
      %s47 = sphi 0, %s47
      %s49 = sphi 0, %s47
      %s50 = sphi 0, %s49
      %s64 = sphi 0, %s50
      %s68 = sphi 0, %s68
      %s70 = sphi 0, %s68
      %s71 = sphi 0, %s70
      %s85 = sphi 0, %s71
      %s89 = sphi 0, %s89
      %s91 = sphi 0, %s89
      %s92 = sphi 0, %s91
      %s106 = sphi 0, %s92
      %s112 = sphi 0, %s114
      %s115 = sphi 0, %s112
      %s116 = sphi 0, %s115
      %s132 = sphi 0, %s116
    $region4: #{tpu_custom_call.1} parent=1 // loop_header_branch
      %16 = sbr.rel (%p14) target = $region8
    $region5: #{tpu_custom_call.1} parent=1 // loop_body
      %s18 = ssub.s32 %s13, 1
      %s19 = ssub.s32 %s13, 2
      %s20 = sadd.s32 %s13, 1
      %s21 = ssub.s32 %s13, %s20
      %p22 = scmp.eq.s32.totalorder %s21, 0
      %s24 = sadd.s32 %s23, 1
      %s25 = scalar_select %p22, %s23, %s24
      %p28 = pneg %p22
      %p29 = scmp.eq.s32.totalorder %s13, 1
      %p30 = por %p28, %p29
      %p31 = scmp.ne.s32.totalorder %s23, %s26
      %p32 = scmp.eq.s32.totalorder %s13, 0
      %p33 = por %p31, %p32
      %p34 = scmp.ne.s32.totalorder %s23, %s26
      %p35 = scmp.eq.s32.totalorder %s18, 1
      %p36 = por %p34, %p35
      %p37 = scmp.ne.s32.totalorder %s26, %s27
      %p38 = scmp.eq.s32.totalorder %s18, 0
      %p39 = por %p37, %p38
      %p40 = scmp.ne.s32.totalorder %s26, %s27
      %p41 = scmp.eq.s32.totalorder %s19, 1
      %p42 = por %p40, %p41
      %p44 = scmp.ne.s32.totalorder %s27, %s43
      %p45 = scmp.eq.s32.totalorder %s19, 0
      %p46 = por %p44, %p45
      %s48 = sadd.s32 %s47, 1
      %p51 = scmp.eq.s32.totalorder %s13, 1
      %p52 = scmp.ne.s32.totalorder %s47, %s49
      %p53 = scmp.eq.s32.totalorder %s13, 0
      %p54 = por %p52, %p53
      %p55 = scmp.ne.s32.totalorder %s47, %s49
      %p56 = scmp.eq.s32.totalorder %s18, 1
      %p57 = por %p55, %p56
      %p58 = scmp.ne.s32.totalorder %s49, %s50
      %p59 = scmp.eq.s32.totalorder %s18, 0
      %p60 = por %p58, %p59
      %p61 = scmp.ne.s32.totalorder %s49, %s50
      %p62 = scmp.eq.s32.totalorder %s19, 1
      %p63 = por %p61, %p62
      %p65 = scmp.ne.s32.totalorder %s50, %s64
      %p66 = scmp.eq.s32.totalorder %s19, 0
      %p67 = por %p65, %p66
      %s69 = sadd.s32 %s68, 1
      %p72 = scmp.eq.s32.totalorder %s13, 1
      %p73 = scmp.ne.s32.totalorder %s68, %s70
      %p74 = scmp.eq.s32.totalorder %s13, 0
      %p75 = por %p73, %p74
      %p76 = scmp.ne.s32.totalorder %s68, %s70
      %p77 = scmp.eq.s32.totalorder %s18, 1
      %p78 = por %p76, %p77
      %p79 = scmp.ne.s32.totalorder %s70, %s71
      %p80 = scmp.eq.s32.totalorder %s18, 0
      %p81 = por %p79, %p80
      %p82 = scmp.ne.s32.totalorder %s70, %s71
      %p83 = scmp.eq.s32.totalorder %s19, 1
      %p84 = por %p82, %p83
      %p86 = scmp.ne.s32.totalorder %s71, %s85
      %p87 = scmp.eq.s32.totalorder %s19, 0
      %p88 = por %p86, %p87
      %s90 = sadd.s32 %s89, 1
      %p93 = scmp.eq.s32.totalorder %s13, 1
      %p94 = scmp.ne.s32.totalorder %s89, %s91
      %p95 = scmp.eq.s32.totalorder %s13, 0
      %p96 = por %p94, %p95
      %p97 = scmp.ne.s32.totalorder %s89, %s91
      %p98 = scmp.eq.s32.totalorder %s18, 1
      %p99 = por %p97, %p98
      %p100 = scmp.ne.s32.totalorder %s91, %s92
      %p101 = scmp.eq.s32.totalorder %s18, 0
      %p102 = por %p100, %p101
      %p103 = scmp.ne.s32.totalorder %s91, %s92
      %p104 = scmp.eq.s32.totalorder %s19, 1
      %p105 = por %p103, %p104
      %p107 = scmp.ne.s32.totalorder %s92, %s106
      %p108 = scmp.eq.s32.totalorder %s19, 0
      %p109 = por %p107, %p108
      %s110 = ssub.s32 %s13, %s20
      %p111 = scmp.eq.s32.totalorder %s110, 0
      %s113 = sadd.s32 %s112, 1
      %s114 = scalar_select %p111, %s112, %s113
      %p117 = pneg %p111
      %p118 = scmp.eq.s32.totalorder %s13, 1
      %p119 = por %p117, %p118
      %p120 = scmp.ne.s32.totalorder %s112, %s115
      %p121 = scmp.eq.s32.totalorder %s13, 0
      %p122 = por %p120, %p121
      %p123 = scmp.ne.s32.totalorder %s112, %s115
      %p124 = scmp.eq.s32.totalorder %s18, 1
      %p125 = por %p123, %p124
      %p126 = scmp.ne.s32.totalorder %s115, %s116
      %p127 = scmp.eq.s32.totalorder %s18, 0
      %p128 = por %p126, %p127
      %p129 = scmp.ne.s32.totalorder %s115, %s116
      %p130 = scmp.eq.s32.totalorder %s19, 1
      %p131 = por %p129, %p130
      %p133 = scmp.ne.s32.totalorder %s116, %s132
      %p134 = scmp.eq.s32.totalorder %s19, 0
      %p135 = por %p133, %p134
      %p136 = scmp.le.s32.totalorder 1, %s13
      %p137 = scmp.lt.s32.totalorder %s13, 3
      %p138 = pnand %p136, %p137
      %p139 = pneg %p138
      // Predicated region
      $region9: #{tpu_custom_call.1} parent=5 // pred_check
        _
      $region10: #{tpu_custom_call.1} parent=5 // pred_check_branch
        %141 = sbr.rel (%p138) target = $region12
      $region11: #{tpu_custom_call.1} parent=5 // pred_region
        %s142 = ssub.s32 %s13, 1
        // Predicated region
        $region13: #{tpu_custom_call.1} parent=11 // pred_check
          %p143 = pneg %p60
        $region14: #{tpu_custom_call.1} parent=11 // pred_check_branch
          %145 = sbr.rel (%p143) target = $region16
        $region15: #{tpu_custom_call.1} parent=11 // pred_region
          _
        $region16: #{tpu_custom_call.1} parent=11 // pred_fallthru
          _
        // Predicated region
        $region17: #{tpu_custom_call.1} parent=11 // pred_check
          %p146 = pneg %p81
        $region18: #{tpu_custom_call.1} parent=11 // pred_check_branch
          %148 = sbr.rel (%p146) target = $region20
        $region19: #{tpu_custom_call.1} parent=11 // pred_region
          _
        $region20: #{tpu_custom_call.1} parent=11 // pred_fallthru
          _
        // Predicated region
        $region21: #{tpu_custom_call.1} parent=11 // pred_check
          %p149 = pneg %p102
        $region22: #{tpu_custom_call.1} parent=11 // pred_check_branch
          %151 = sbr.rel (%p149) target = $region24
        $region23: #{tpu_custom_call.1} parent=11 // pred_region
          _
        $region24: #{tpu_custom_call.1} parent=11 // pred_fallthru
          _
      $region12: #{tpu_custom_call.1} parent=5 // pred_fallthru
        _
      %p152 = scmp.lt.s32.totalorder %s13, 2
      // Predicated region
      $region25: #{tpu_custom_call.1} parent=5 // pred_check
        %p153 = pneg %p152
      $region26: #{tpu_custom_call.1} parent=5 // pred_check_branch
        %155 = sbr.rel (%p153) target = $region28
      $region27: #{tpu_custom_call.1} parent=5 // pred_region
        // Predicated region
        $region29: #{tpu_custom_call.1} parent=27 // pred_check
          %p156 = pneg %p33
        $region30: #{tpu_custom_call.1} parent=27 // pred_check_branch
          %158 = sbr.rel (%p156) target = $region32
        $region31: #{tpu_custom_call.1} parent=27 // pred_region
          %s159 = smul.u32 8, %s13
          %p160 = scmp.lt.s32.totalorder %s159, 15
          %s161 = scalar_select %p160, %s159, 15
          %s162 = smul.addr %s161, 3
          %s163 = smul.addr %s162, 4
          %s164 = scalar_lea.vmem %s0, %s163
          %s165 = smul.u32 8, %s13
        $region32: #{tpu_custom_call.1} parent=27 // pred_fallthru
          _
      $region28: #{tpu_custom_call.1} parent=5 // pred_fallthru
        _
      %p166 = scmp.le.s32.totalorder 1, %s13
      %p167 = scmp.lt.s32.totalorder %s13, 3
      %p168 = pnand %p166, %p167
      %p169 = pneg %p168
      // Predicated region
      $region33: #{tpu_custom_call.1} parent=5 // pred_check
        _
      $region34: #{tpu_custom_call.1} parent=5 // pred_check_branch
        %171 = sbr.rel (%p168) target = $region36
      $region35: #{tpu_custom_call.1} parent=5 // pred_region
        %s172 = ssub.s32 %s13, 1
        %s173 = smul.u32 8, %s18
        %p174 = scmp.lt.s32.totalorder %s173, 15
        %s175 = scalar_select %p174, %s173, 15
        %s176 = smul.addr %s175, 3
        %s177 = smul.addr %s176, 4
        %s178 = scalar_lea.vmem %s0, %s177
        %p179 = pneg %p39
        %p180 = pneg %p36
        %p181 = pneg %p60
        %p182 = pneg %p57
        %p183 = pneg %p81
        %p184 = pneg %p78
        %p185 = pneg %p102
        %p186 = pneg %p99
        %p187 = pneg %p128
        %p188 = pneg %p125
        %s189 = sand.u32 %s115, 1
        %s190 = scalar_lea.sflag [#allocation3], %s189
        %s191 = sand.u32 %s115, 1
        %s192 = smul.addr %s191, 8
        %s193 = scalar_lea.vmem [#allocation2], %s192
        %s194 = smul.u32 8, %s18
        %p195 = scmp.lt.s32.totalorder %s194, 15
        %s196 = scalar_select %p195, %s194, 15
        %s197 = smul.addr %s196, 3
        %s198 = smul.addr %s197, 4
        %s199 = scalar_lea.vmem %s0, %s198
        %s200 = smul.u32 8, %s18
        %v202 = vld [vmem:[%s199] sm:$0xf]
        %v203 = vld [vmem:[%s199 + $0x4] sm:$0xf]
        %v204 = vld [vmem:[%s199 + $0xc] sm:$0xf]
        %v205 = vld [vmem:[%s199 + $0x10] sm:$0xf]
        %v206 = vld [vmem:[%s199 + $0x18] sm:$0xf]
        %v207 = vld [vmem:[%s199 + $0x1c] sm:$0xf]
        %v208 = vld [vmem:[%s199 + $0x24] sm:$0xf]
        %v209 = vld [vmem:[%s199 + $0x28] sm:$0xf]
        %v210 = vld [vmem:[%s199 + $0x30] sm:$0xf]
        %v211 = vld [vmem:[%s199 + $0x34] sm:$0xf]
        %v212 = vld [vmem:[%s199 + $0x3c] sm:$0xf]
        %v213 = vld [vmem:[%s199 + $0x40] sm:$0xf]
        %v214 = vld [vmem:[%s199 + $0x48] sm:$0xf]
        %v215 = vld [vmem:[%s199 + $0x4c] sm:$0xf]
        %v216 = vld [vmem:[%s199 + $0x54] sm:$0xf]
        %v217 = vld [vmem:[%s199 + $0x58] sm:$0xf]
        %v218 = vld [vmem:[%s199 + $0x8] sm:$0x1]
        %v219 = vld [vmem:[%s199 + $0x14] sm:$0x1]
        %v220 = vld [vmem:[%s199 + $0x20] sm:$0x1]
        %v221 = vld [vmem:[%s199 + $0x2c] sm:$0x1]
        %v222 = vld [vmem:[%s199 + $0x38] sm:$0x1]
        %v223 = vld [vmem:[%s199 + $0x44] sm:$0x1]
        %v224 = vld [vmem:[%s199 + $0x50] sm:$0x1]
        %v225 = vld [vmem:[%s199 + $0x5c] sm:$0x1]
        %v226 = vld [vmem:[%s199] sm:$0xe]
        %v227 = vld [vmem:[%s199 + $0xc] sm:$0xe]
        %v228 = vld [vmem:[%s199 + $0x18] sm:$0xe]
        %v229 = vld [vmem:[%s199 + $0x24] sm:$0xe]
        %v230 = vld [vmem:[%s199 + $0x30] sm:$0xe]
        %v231 = vld [vmem:[%s199 + $0x3c] sm:$0xe]
        %v232 = vld [vmem:[%s199 + $0x48] sm:$0xe]
        %v233 = vld [vmem:[%s199 + $0x54] sm:$0xe]
        %v234 = vld [vmem:[%s199 + $0x8] sm:$0x3]
        %v235 = vld [vmem:[%s199 + $0x14] sm:$0x3]
        %v236 = vld [vmem:[%s199 + $0x20] sm:$0x3]
        %v237 = vld [vmem:[%s199 + $0x2c] sm:$0x3]
        %v238 = vld [vmem:[%s199 + $0x38] sm:$0x3]
        %v239 = vld [vmem:[%s199 + $0x44] sm:$0x3]
        %v240 = vld [vmem:[%s199 + $0x50] sm:$0x3]
        %v241 = vld [vmem:[%s199 + $0x5c] sm:$0x3]
        %v258 = vunpack.c.l.b16 %v202
        %v259 = vunpack.c.l.b16 %v203
        %v260 = vunpack.c.l.b16 %v204
        %v261 = vunpack.c.l.b16 %v205
        %v262 = vunpack.c.l.b16 %v206
        %v263 = vunpack.c.l.b16 %v207
        %v264 = vunpack.c.l.b16 %v208
        %v265 = vunpack.c.l.b16 %v209
        %v266 = vunpack.c.l.b16 %v210
        %v267 = vunpack.c.l.b16 %v211
        %v268 = vunpack.c.l.b16 %v212
        %v269 = vunpack.c.l.b16 %v213
        %v270 = vunpack.c.l.b16 %v214
        %v271 = vunpack.c.l.b16 %v215
        %v272 = vunpack.c.l.b16 %v216
        %v273 = vunpack.c.l.b16 %v217
        %v274 = vpack.c.b16 %v259, %v258
        %v275 = vpack.c.b16 %v261, %v260
        %v276 = vpack.c.b16 %v263, %v262
        %v277 = vpack.c.b16 %v265, %v264
        %v278 = vpack.c.b16 %v267, %v266
        %v279 = vpack.c.b16 %v269, %v268
        %v280 = vpack.c.b16 %v271, %v270
        %v281 = vpack.c.b16 %v273, %v272
        %v290 = vunpack.c.l.b16 %v218
        %v291 = vunpack.c.l.b16 %v219
        %v292 = vunpack.c.l.b16 %v220
        %v293 = vunpack.c.l.b16 %v221
        %v294 = vunpack.c.l.b16 %v222
        %v295 = vunpack.c.l.b16 %v223
        %v296 = vunpack.c.l.b16 %v224
        %v297 = vunpack.c.l.b16 %v225
        %v298 = vpack.c.b16 %v290, %v290
        %v299 = vpack.c.b16 %v291, %v291
        %v300 = vpack.c.b16 %v292, %v292
        %v301 = vpack.c.b16 %v293, %v293
        %v302 = vpack.c.b16 %v294, %v294
        %v303 = vpack.c.b16 %v295, %v295
        %v304 = vpack.c.b16 %v296, %v296
        %v305 = vpack.c.b16 %v297, %v297
        %vm306 = vsmask.f32 7424
        %v308 = vshrl.u32 %v274, 16
        %v310 = vshll.u32 %v274, 16
        %v312 = vrot.slane %v310, 1
        %v313 = vor.u32 %v308, %v312
        %v315 = vshll.u32 %v298, 16
        %v317 = vrot.slane %v315, 1
        %v318 = vsel %vm306, %v313, %v317
        %v320 = vshrl.u32 %v275, 16
        %v322 = vshll.u32 %v275, 16
        %v324 = vrot.slane %v322, 1
        %v325 = vor.u32 %v320, %v324
        %v327 = vshll.u32 %v299, 16
        %v329 = vrot.slane %v327, 1
        %v330 = vsel %vm306, %v325, %v329
        %v332 = vshrl.u32 %v276, 16
        %v334 = vshll.u32 %v276, 16
        %v336 = vrot.slane %v334, 1
        %v337 = vor.u32 %v332, %v336
        %v339 = vshll.u32 %v300, 16
        %v341 = vrot.slane %v339, 1
        %v342 = vsel %vm306, %v337, %v341
        %v344 = vshrl.u32 %v277, 16
        %v346 = vshll.u32 %v277, 16
        %v348 = vrot.slane %v346, 1
        %v349 = vor.u32 %v344, %v348
        %v351 = vshll.u32 %v301, 16
        %v353 = vrot.slane %v351, 1
        %v354 = vsel %vm306, %v349, %v353
        %v356 = vshrl.u32 %v278, 16
        %v358 = vshll.u32 %v278, 16
        %v360 = vrot.slane %v358, 1
        %v361 = vor.u32 %v356, %v360
        %v363 = vshll.u32 %v302, 16
        %v365 = vrot.slane %v363, 1
        %v366 = vsel %vm306, %v361, %v365
        %v368 = vshrl.u32 %v279, 16
        %v370 = vshll.u32 %v279, 16
        %v372 = vrot.slane %v370, 1
        %v373 = vor.u32 %v368, %v372
        %v375 = vshll.u32 %v303, 16
        %v377 = vrot.slane %v375, 1
        %v378 = vsel %vm306, %v373, %v377
        %v380 = vshrl.u32 %v280, 16
        %v382 = vshll.u32 %v280, 16
        %v384 = vrot.slane %v382, 1
        %v385 = vor.u32 %v380, %v384
        %v387 = vshll.u32 %v304, 16
        %v389 = vrot.slane %v387, 1
        %v390 = vsel %vm306, %v385, %v389
        %v392 = vshrl.u32 %v281, 16
        %v394 = vshll.u32 %v281, 16
        %v396 = vrot.slane %v394, 1
        %v397 = vor.u32 %v392, %v396
        %v399 = vshll.u32 %v305, 16
        %v401 = vrot.slane %v399, 1
        %v402 = vsel %vm306, %v397, %v401
        %403 = vrot.lane.b32.xlu0 %v318, 32
        %v404 = vpop.permute.xlu0 %403
        %405 = vrot.lane.b32.xlu0 %v330, 32
        %v406 = vpop.permute.xlu0 %405
        %407 = vrot.lane.b32.xlu0 %v342, 32
        %v408 = vpop.permute.xlu0 %407
        %409 = vrot.lane.b32.xlu0 %v354, 32
        %v410 = vpop.permute.xlu0 %409
        %411 = vrot.lane.b32.xlu0 %v366, 32
        %v412 = vpop.permute.xlu0 %411
        %413 = vrot.lane.b32.xlu0 %v378, 32
        %v414 = vpop.permute.xlu0 %413
        %415 = vrot.lane.b32.xlu0 %v390, 32
        %v416 = vpop.permute.xlu0 %415
        %417 = vrot.lane.b32.xlu0 %v402, 32
        %v418 = vpop.permute.xlu0 %417
        %v427 = vunpack.c.l.b16 %v226
        %v428 = vunpack.c.l.b16 %v227
        %v429 = vunpack.c.l.b16 %v228
        %v430 = vunpack.c.l.b16 %v229
        %v431 = vunpack.c.l.b16 %v230
        %v432 = vunpack.c.l.b16 %v231
        %v433 = vunpack.c.l.b16 %v232
        %v434 = vunpack.c.l.b16 %v233
        %v435 = vpack.c.b16 %v259, %v427
        %v436 = vpack.c.b16 %v261, %v428
        %v437 = vpack.c.b16 %v263, %v429
        %v438 = vpack.c.b16 %v265, %v430
        %v439 = vpack.c.b16 %v267, %v431
        %v440 = vpack.c.b16 %v269, %v432
        %v441 = vpack.c.b16 %v271, %v433
        %v442 = vpack.c.b16 %v273, %v434
        %vm443 = vcmask 1046528
        %v444 = vrot.slane %v435, 1
        %v445 = vrot.slane %v298, 1
        %v446 = vsel %vm443, %v444, %v445
        %v447 = vrot.slane %v436, 1
        %v448 = vrot.slane %v299, 1
        %v449 = vsel %vm443, %v447, %v448
        %v450 = vrot.slane %v437, 1
        %v451 = vrot.slane %v300, 1
        %v452 = vsel %vm443, %v450, %v451
        %v453 = vrot.slane %v438, 1
        %v454 = vrot.slane %v301, 1
        %v455 = vsel %vm443, %v453, %v454
        %v456 = vrot.slane %v439, 1
        %v457 = vrot.slane %v302, 1
        %v458 = vsel %vm443, %v456, %v457
        %v459 = vrot.slane %v440, 1
        %v460 = vrot.slane %v303, 1
        %v461 = vsel %vm443, %v459, %v460
        %v462 = vrot.slane %v441, 1
        %v463 = vrot.slane %v304, 1
        %v464 = vsel %vm443, %v462, %v463
        %v465 = vrot.slane %v442, 1
        %v466 = vrot.slane %v305, 1
        %v467 = vsel %vm443, %v465, %v466
        %468 = vrot.lane.b32.xlu0 %v446, 64
        %v469 = vpop.permute.xlu0 %468
        %470 = vrot.lane.b32.xlu0 %v449, 64
        %v471 = vpop.permute.xlu0 %470
        %472 = vrot.lane.b32.xlu0 %v452, 64
        %v473 = vpop.permute.xlu0 %472
        %474 = vrot.lane.b32.xlu0 %v455, 64
        %v475 = vpop.permute.xlu0 %474
        %476 = vrot.lane.b32.xlu0 %v458, 64
        %v477 = vpop.permute.xlu0 %476
        %478 = vrot.lane.b32.xlu0 %v461, 64
        %v479 = vpop.permute.xlu0 %478
        %480 = vrot.lane.b32.xlu0 %v464, 64
        %v481 = vpop.permute.xlu0 %480
        %482 = vrot.lane.b32.xlu0 %v467, 64
        %v483 = vpop.permute.xlu0 %482
        %v492 = vunpack.c.l.b16 %v234
        %v493 = vunpack.c.l.b16 %v235
        %v494 = vunpack.c.l.b16 %v236
        %v495 = vunpack.c.l.b16 %v237
        %v496 = vunpack.c.l.b16 %v238
        %v497 = vunpack.c.l.b16 %v239
        %v498 = vunpack.c.l.b16 %v240
        %v499 = vunpack.c.l.b16 %v241
        %v500 = vpack.c.b16 %v492, %v492
        %v501 = vpack.c.b16 %v493, %v493
        %v502 = vpack.c.b16 %v494, %v494
        %v503 = vpack.c.b16 %v495, %v495
        %v504 = vpack.c.b16 %v496, %v496
        %v505 = vpack.c.b16 %v497, %v497
        %v506 = vpack.c.b16 %v498, %v498
        %v507 = vpack.c.b16 %v499, %v499
        %vm508 = vsmask.f32 6400
        %v510 = vshrl.u32 %v435, 16
        %v512 = vrot.slane %v510, 1
        %v513 = vshll.u32 %v435, 16
        %v515 = vrot.slane %v513, 2
        %v516 = vor.u32 %v512, %v515
        %v518 = vshrl.u32 %v500, 16
        %v520 = vrot.slane %v518, 1
        %v521 = vshll.u32 %v500, 16
        %v523 = vrot.slane %v521, 2
        %v524 = vor.u32 %v520, %v523
        %v525 = vsel %vm508, %v516, %v524
        %v527 = vshrl.u32 %v436, 16
        %v529 = vrot.slane %v527, 1
        %v530 = vshll.u32 %v436, 16
        %v532 = vrot.slane %v530, 2
        %v533 = vor.u32 %v529, %v532
        %v535 = vshrl.u32 %v501, 16
        %v537 = vrot.slane %v535, 1
        %v538 = vshll.u32 %v501, 16
        %v540 = vrot.slane %v538, 2
        %v541 = vor.u32 %v537, %v540
        %v542 = vsel %vm508, %v533, %v541
        %v544 = vshrl.u32 %v437, 16
        %v546 = vrot.slane %v544, 1
        %v547 = vshll.u32 %v437, 16
        %v549 = vrot.slane %v547, 2
        %v550 = vor.u32 %v546, %v549
        %v552 = vshrl.u32 %v502, 16
        %v554 = vrot.slane %v552, 1
        %v555 = vshll.u32 %v502, 16
        %v557 = vrot.slane %v555, 2
        %v558 = vor.u32 %v554, %v557
        %v559 = vsel %vm508, %v550, %v558
        %v561 = vshrl.u32 %v438, 16
        %v563 = vrot.slane %v561, 1
        %v564 = vshll.u32 %v438, 16
        %v566 = vrot.slane %v564, 2
        %v567 = vor.u32 %v563, %v566
        %v569 = vshrl.u32 %v503, 16
        %v571 = vrot.slane %v569, 1
        %v572 = vshll.u32 %v503, 16
        %v574 = vrot.slane %v572, 2
        %v575 = vor.u32 %v571, %v574
        %v576 = vsel %vm508, %v567, %v575
        %v578 = vshrl.u32 %v439, 16
        %v580 = vrot.slane %v578, 1
        %v581 = vshll.u32 %v439, 16
        %v583 = vrot.slane %v581, 2
        %v584 = vor.u32 %v580, %v583
        %v586 = vshrl.u32 %v504, 16
        %v588 = vrot.slane %v586, 1
        %v589 = vshll.u32 %v504, 16
        %v591 = vrot.slane %v589, 2
        %v592 = vor.u32 %v588, %v591
        %v593 = vsel %vm508, %v584, %v592
        %v595 = vshrl.u32 %v440, 16
        %v597 = vrot.slane %v595, 1
        %v598 = vshll.u32 %v440, 16
        %v600 = vrot.slane %v598, 2
        %v601 = vor.u32 %v597, %v600
        %v603 = vshrl.u32 %v505, 16
        %v605 = vrot.slane %v603, 1
        %v606 = vshll.u32 %v505, 16
        %v608 = vrot.slane %v606, 2
        %v609 = vor.u32 %v605, %v608
        %v610 = vsel %vm508, %v601, %v609
        %v612 = vshrl.u32 %v441, 16
        %v614 = vrot.slane %v612, 1
        %v615 = vshll.u32 %v441, 16
        %v617 = vrot.slane %v615, 2
        %v618 = vor.u32 %v614, %v617
        %v620 = vshrl.u32 %v506, 16
        %v622 = vrot.slane %v620, 1
        %v623 = vshll.u32 %v506, 16
        %v625 = vrot.slane %v623, 2
        %v626 = vor.u32 %v622, %v625
        %v627 = vsel %vm508, %v618, %v626
        %v629 = vshrl.u32 %v442, 16
        %v631 = vrot.slane %v629, 1
        %v632 = vshll.u32 %v442, 16
        %v634 = vrot.slane %v632, 2
        %v635 = vor.u32 %v631, %v634
        %v637 = vshrl.u32 %v507, 16
        %v639 = vrot.slane %v637, 1
        %v640 = vshll.u32 %v507, 16
        %v642 = vrot.slane %v640, 2
        %v643 = vor.u32 %v639, %v642
        %v644 = vsel %vm508, %v635, %v643
        %645 = vrot.lane.b32.xlu0 %v525, 96
        %v646 = vpop.permute.xlu0 %645
        %647 = vrot.lane.b32.xlu0 %v542, 96
        %v648 = vpop.permute.xlu0 %647
        %649 = vrot.lane.b32.xlu0 %v559, 96
        %v650 = vpop.permute.xlu0 %649
        %651 = vrot.lane.b32.xlu0 %v576, 96
        %v652 = vpop.permute.xlu0 %651
        %653 = vrot.lane.b32.xlu0 %v593, 96
        %v654 = vpop.permute.xlu0 %653
        %655 = vrot.lane.b32.xlu0 %v610, 96
        %v656 = vpop.permute.xlu0 %655
        %657 = vrot.lane.b32.xlu0 %v627, 96
        %v658 = vpop.permute.xlu0 %657
        %659 = vrot.lane.b32.xlu0 %v644, 96
        %v660 = vpop.permute.xlu0 %659
        %vm661 = vcmask 261120
        %v663 = vsel %vm661, %v274, %v404
        %v665 = vsel %vm661, %v275, %v406
        %v667 = vsel %vm661, %v276, %v408
        %v669 = vsel %vm661, %v277, %v410
        %v671 = vsel %vm661, %v278, %v412
        %v673 = vsel %vm661, %v279, %v414
        %v675 = vsel %vm661, %v280, %v416
        %v677 = vsel %vm661, %v281, %v418
        %vm678 = vcmask 523264
        %v680 = vsel %vm678, %v663, %v469
        %v682 = vsel %vm678, %v665, %v471
        %v684 = vsel %vm678, %v667, %v473
        %v686 = vsel %vm678, %v669, %v475
        %v688 = vsel %vm678, %v671, %v477
        %v690 = vsel %vm678, %v673, %v479
        %v692 = vsel %vm678, %v675, %v481
        %v694 = vsel %vm678, %v677, %v483
        %vm695 = vcmask 785408
        %v697 = vsel %vm695, %v680, %v646
        %v700 = vsel %vm695, %v682, %v648
        %v703 = vsel %vm695, %v684, %v650
        %v706 = vsel %vm695, %v686, %v652
        %v709 = vsel %vm695, %v688, %v654
        %v712 = vsel %vm695, %v690, %v656
        %v715 = vsel %vm695, %v692, %v658
        %v718 = vsel %vm695, %v694, %v660
        %v720 = vld [vmem:[%s1] sm:$0xf]
        %v721 = vld [vmem:[%s1 + $0x4] sm:$0xf]
        %v722 = vld [vmem:[%s1 + $0x8] sm:$0xf]
        %v723 = vld [vmem:[%s1 + $0xc] sm:$0xf]
        %v724 = vld [vmem:[%s1 + $0x10] sm:$0xf]
        %v725 = vld [vmem:[%s1 + $0x14] sm:$0xf]
        %v726 = vld [vmem:[%s1 + $0x18] sm:$0xf]
        %v727 = vld [vmem:[%s1 + $0x1c] sm:$0xf]
        %v728 = vld [vmem:[%s1 + $0x20] sm:$0xf]
        %v729 = vld [vmem:[%s1 + $0x24] sm:$0xf]
        %v730 = vld [vmem:[%s1 + $0x28] sm:$0xf]
        %v731 = vld [vmem:[%s1 + $0x2c] sm:$0xf]
        %v732 = vld [vmem:[%s1 + $0x30] sm:$0xf]
        %v733 = vld [vmem:[%s1 + $0x34] sm:$0xf]
        %v734 = vld [vmem:[%s1 + $0x38] sm:$0xf]
        %v735 = vld [vmem:[%s1 + $0x3c] sm:$0xf]
        %v736 = vld [vmem:[%s2] sm:$0x1]
        %v738 = vlaneseq
        %v739 = vshrl.u32 %v738, 7
        %v740 = vsub.s32 0, %v739
        %v741 = vrot.slane %v736, %v740
        %v759 = vunpack.c.l.b16 %v720
        %v760 = vunpack.c.l.b16 %v721
        %v761 = vunpack.c.l.b16 %v722
        %v762 = vunpack.c.l.b16 %v723
        %v763 = vunpack.c.l.b16 %v724
        %v764 = vunpack.c.l.b16 %v725
        %v765 = vunpack.c.l.b16 %v726
        %v766 = vunpack.c.l.b16 %v727
        %v767 = vunpack.c.l.b16 %v728
        %v768 = vunpack.c.l.b16 %v729
        %v769 = vunpack.c.l.b16 %v730
        %v770 = vunpack.c.l.b16 %v731
        %v771 = vunpack.c.l.b16 %v732
        %v772 = vunpack.c.l.b16 %v733
        %v773 = vunpack.c.l.b16 %v734
        %v774 = vunpack.c.l.b16 %v735
        %v775 = vpack.c.b16 %v760, %v759
        %v776 = vpack.c.b16 %v762, %v761
        %v777 = vpack.c.b16 %v764, %v763
        %v778 = vpack.c.b16 %v766, %v765
        %v779 = vpack.c.b16 %v768, %v767
        %v780 = vpack.c.b16 %v770, %v769
        %v781 = vpack.c.b16 %v772, %v771
        %v782 = vpack.c.b16 %v774, %v773
        %791 = vmatprep.subr.bf16.mxu0 0
        %792 = vmatpush1.bf16.msra.mxu0 %v782
        %793 = vmatprep.subr.bf16.mxu0 0
        %794 = vmatpush1.bf16.msra.mxu0 %v781
        %795 = vmatprep.subr.bf16.mxu0 0
        %796 = vmatpush1.bf16.msra.mxu0 %v780
        %797 = vmatprep.subr.bf16.mxu0 0
        %798 = vmatpush1.bf16.msra.mxu0 %v779
        %799 = vmatprep.subr.bf16.mxu0 0
        %800 = vmatpush1.bf16.msra.mxu0 %v778
        %801 = vmatprep.subr.bf16.mxu0 0
        %802 = vmatpush1.bf16.msra.mxu0 %v777
        %803 = vmatprep.subr.bf16.mxu0 0
        %804 = vmatpush1.bf16.msra.mxu0 %v776
        %805 = vmatprep.subr.bf16.mxu0 0
        %806 = vmatpush1.bf16.msra.mxu0 %v775
        %807 = vmatprep.subr.bf16.mxu0 0
        %808 = vmatpush2.bf16.msra.mxu0 0
        %809 = vmatprep.subr.bf16.mxu0 0
        %810 = vmatpush2.bf16.msra.mxu0 0
        %811 = vmatprep.subr.bf16.mxu0 0
        %812 = vmatpush2.bf16.msra.mxu0 0
        %813 = vmatprep.subr.bf16.mxu0 0
        %814 = vmatpush2.bf16.msra.mxu0 0
        %815 = vmatprep.subr.bf16.mxu0 0
        %816 = vmatpush2.bf16.msra.mxu0 0
        %817 = vmatprep.subr.bf16.mxu0 0
        %818 = vmatpush2.bf16.msra.mxu0 0
        %819 = vmatprep.subr.bf16.mxu0 0
        %820 = vmatpush2.bf16.msra.mxu0 0
        %821 = vmatprep.subr.bf16.mxu0 0
        %822 = vmatpush2.bf16.msra.mxu0 0
        %823 = vmatprep.mubr.bf16.mxu0 0
        %824 = vmatmul.mubr.bf16.gmra.mxu0 %v697
        %v825 = vpop.f32.mrf.mxu0
        %v826 = vadd.f32 %v741, %v825
        %v827 = vpop.f32.mrf.mxu0
        %v828 = vpop.f32.mrf.mxu0
        %v829 = vadd.f32 %v741, %v828
        %v830 = vpop.f32.mrf.mxu0
        %831 = vmatprep.mubr.bf16.mxu0 0
        %832 = vmatmul.mubr.bf16.gmra.mxu0 %v700
        %v833 = vpop.f32.mrf.mxu0
        %v834 = vadd.f32 %v741, %v833
        %v835 = vpop.f32.mrf.mxu0
        %v836 = vpop.f32.mrf.mxu0
        %v837 = vadd.f32 %v741, %v836
        %v838 = vpop.f32.mrf.mxu0
        %839 = vmatprep.mubr.bf16.mxu0 0
        %840 = vmatmul.mubr.bf16.gmra.mxu0 %v703
        %v841 = vpop.f32.mrf.mxu0
        %v842 = vadd.f32 %v741, %v841
        %v843 = vpop.f32.mrf.mxu0
        %v844 = vpop.f32.mrf.mxu0
        %v845 = vadd.f32 %v741, %v844
        %v846 = vpop.f32.mrf.mxu0
        %847 = vmatprep.mubr.bf16.mxu0 0
        %848 = vmatmul.mubr.bf16.gmra.mxu0 %v706
        %v849 = vpop.f32.mrf.mxu0
        %v850 = vadd.f32 %v741, %v849
        %v851 = vpop.f32.mrf.mxu0
        %v852 = vpop.f32.mrf.mxu0
        %v853 = vadd.f32 %v741, %v852
        %v854 = vpop.f32.mrf.mxu0
        %855 = vmatprep.mubr.bf16.mxu0 0
        %856 = vmatmul.mubr.bf16.gmra.mxu0 %v709
        %v857 = vpop.f32.mrf.mxu0
        %v858 = vadd.f32 %v741, %v857
        %v859 = vpop.f32.mrf.mxu0
        %v860 = vpop.f32.mrf.mxu0
        %v861 = vadd.f32 %v741, %v860
        %v862 = vpop.f32.mrf.mxu0
        %863 = vmatprep.mubr.bf16.mxu0 0
        %864 = vmatmul.mubr.bf16.gmra.mxu0 %v712
        %v865 = vpop.f32.mrf.mxu0
        %v866 = vadd.f32 %v741, %v865
        %v867 = vpop.f32.mrf.mxu0
        %v868 = vpop.f32.mrf.mxu0
        %v869 = vadd.f32 %v741, %v868
        %v870 = vpop.f32.mrf.mxu0
        %871 = vmatprep.mubr.bf16.mxu0 0
        %872 = vmatmul.mubr.bf16.gmra.mxu0 %v715
        %v873 = vpop.f32.mrf.mxu0
        %v874 = vadd.f32 %v741, %v873
        %v875 = vpop.f32.mrf.mxu0
        %v876 = vpop.f32.mrf.mxu0
        %v877 = vadd.f32 %v741, %v876
        %v878 = vpop.f32.mrf.mxu0
        %879 = vmatprep.mubr.bf16.mxu0 0
        %880 = vmatmul.mubr.bf16.gmra.mxu0 %v718
        %v881 = vpop.f32.mrf.mxu0
        %v882 = vadd.f32 %v741, %v881
        %v883 = vpop.f32.mrf.mxu0
        %v884 = vpop.f32.mrf.mxu0
        %v885 = vadd.f32 %v741, %v884
        %v886 = vpop.f32.mrf.mxu0
        %887 = vdwg.mxu0
        %v888 = vmax.f32 %v826, 0.0
        %v889 = vmax.f32 %v829, 0.0
        %v890 = vmax.f32 %v834, 0.0
        %v891 = vmax.f32 %v837, 0.0
        %v892 = vmax.f32 %v842, 0.0
        %v893 = vmax.f32 %v845, 0.0
        %v894 = vmax.f32 %v850, 0.0
        %v895 = vmax.f32 %v853, 0.0
        %v896 = vmax.f32 %v858, 0.0
        %v897 = vmax.f32 %v861, 0.0
        %v898 = vmax.f32 %v866, 0.0
        %v899 = vmax.f32 %v869, 0.0
        %v900 = vmax.f32 %v874, 0.0
        %v901 = vmax.f32 %v877, 0.0
        %v902 = vmax.f32 %v882, 0.0
        %v903 = vmax.f32 %v885, 0.0
        %v904 = vld [vmem:[%s3] sm:$0xff]
        %v905 = vld [vmem:[%s3 + $0x8] sm:$0xff]
        %v906 = vmul.f32 %v888, %v904
        %v907 = vmul.f32 %v889, %v905
        %v908 = vmul.f32 %v890, %v904
        %v909 = vmul.f32 %v891, %v905
        %v910 = vmul.f32 %v892, %v904
        %v911 = vmul.f32 %v893, %v905
        %v912 = vmul.f32 %v894, %v904
        %v913 = vmul.f32 %v895, %v905
        %v914 = vmul.f32 %v896, %v904
        %v915 = vmul.f32 %v897, %v905
        %v916 = vmul.f32 %v898, %v904
        %v917 = vmul.f32 %v899, %v905
        %v918 = vmul.f32 %v900, %v904
        %v919 = vmul.f32 %v901, %v905
        %v920 = vmul.f32 %v902, %v904
        %v921 = vmul.f32 %v903, %v905
        %v922 = vmax.f32 %v906, %v907
        %v923 = vrot.slane %v922, 4
        %v924 = vmax.f32 %v922, %v923
        %v925 = vrot.slane %v924, 2
        %v926 = vmax.f32 %v924, %v925
        %v927 = vrot.slane %v926, 1
        %v928 = vmax.f32 %v926, %v927
        %v929 = vmax.f32 %v908, %v909
        %v930 = vrot.slane %v929, 4
        %v931 = vmax.f32 %v929, %v930
        %v932 = vrot.slane %v931, 2
        %v933 = vmax.f32 %v931, %v932
        %v934 = vrot.slane %v933, 1
        %v935 = vmax.f32 %v933, %v934
        %v936 = vmax.f32 %v910, %v911
        %v937 = vrot.slane %v936, 4
        %v938 = vmax.f32 %v936, %v937
        %v939 = vrot.slane %v938, 2
        %v940 = vmax.f32 %v938, %v939
        %v941 = vrot.slane %v940, 1
        %v942 = vmax.f32 %v940, %v941
        %v943 = vmax.f32 %v912, %v913
        %v944 = vrot.slane %v943, 4
        %v945 = vmax.f32 %v943, %v944
        %v946 = vrot.slane %v945, 2
        %v947 = vmax.f32 %v945, %v946
        %v948 = vrot.slane %v947, 1
        %v949 = vmax.f32 %v947, %v948
        %v950 = vmax.f32 %v914, %v915
        %v951 = vrot.slane %v950, 4
        %v952 = vmax.f32 %v950, %v951
        %v953 = vrot.slane %v952, 2
        %v954 = vmax.f32 %v952, %v953
        %v955 = vrot.slane %v954, 1
        %v956 = vmax.f32 %v954, %v955
        %v957 = vmax.f32 %v916, %v917
        %v958 = vrot.slane %v957, 4
        %v959 = vmax.f32 %v957, %v958
        %v960 = vrot.slane %v959, 2
        %v961 = vmax.f32 %v959, %v960
        %v962 = vrot.slane %v961, 1
        %v963 = vmax.f32 %v961, %v962
        %v964 = vmax.f32 %v918, %v919
        %v965 = vrot.slane %v964, 4
        %v966 = vmax.f32 %v964, %v965
        %v967 = vrot.slane %v966, 2
        %v968 = vmax.f32 %v966, %v967
        %v969 = vrot.slane %v968, 1
        %v970 = vmax.f32 %v968, %v969
        %v971 = vmax.f32 %v920, %v921
        %v972 = vrot.slane %v971, 4
        %v973 = vmax.f32 %v971, %v972
        %v974 = vrot.slane %v973, 2
        %v975 = vmax.f32 %v973, %v974
        %v976 = vrot.slane %v975, 1
        %v977 = vmax.f32 %v975, %v976
        %vm986 = vcmask 1041409
        %v987 = vsel %vm986, %v935, %v928
        %vm988 = vcmask 1042434
        %v989 = vsel %vm988, %v942, %v987
        %vm990 = vcmask 1043459
        %v991 = vsel %vm990, %v949, %v989
        %vm992 = vcmask 1044484
        %v993 = vsel %vm992, %v956, %v991
        %vm994 = vcmask 1045509
        %v995 = vsel %vm994, %v963, %v993
        %vm996 = vcmask 1046534
        %v997 = vsel %vm996, %v970, %v995
        %vm998 = vcmask 1047559
        %v999 = vsel %vm998, %v977, %v997
        %1001 = vst [vmem:[%s193] sm:$0xff] %v999
        %s1002 = sand.u32 %s115, 1
        %s1003 = scalar_lea.sflag [#allocation3], %s1002
        %s1004 = sand.u32 %s115, 1
        %s1005 = smul.addr %s1004, 8
        %s1006 = scalar_lea.vmem [#allocation2], %s1005
        // Predicated region
        $region37: #{tpu_custom_call.1} parent=35 // pred_check
          %p1007 = pneg %p125
        $region38: #{tpu_custom_call.1} parent=35 // pred_check_branch
          %1009 = sbr.rel (%p1007) target = $region40
        $region39: #{tpu_custom_call.1} parent=35 // pred_region
          %s1011 = ssub.s32 128, 128
          %1012 = vsyncadd %s1003, %s1011
          %s1013 = smul.addr %s18, 128
          %s1014 = scalar_lea.hbm %s4, %s1013
          %s1016 = sshll.u32 %s1006, 4
          %s1017 = int_to_ptr.vmem [resolvable:$true] %s1016
          %1019 = dma.vmem_to_hbm [thread:$0]  %s1017, 128, %s1014, %s1003
        $region40: #{tpu_custom_call.1} parent=35 // pred_fallthru
          _
      $region36: #{tpu_custom_call.1} parent=5 // pred_fallthru
        _
      %p1020 = scmp.le.s32.totalorder 2, %s13
      // Predicated region
      $region41: #{tpu_custom_call.1} parent=5 // pred_check
        %p1021 = pneg %p1020
      $region42: #{tpu_custom_call.1} parent=5 // pred_check_branch
        %1023 = sbr.rel (%p1021) target = $region44
      $region43: #{tpu_custom_call.1} parent=5 // pred_region
        %s1024 = ssub.s32 %s13, 2
        // Predicated region
        $region45: #{tpu_custom_call.1} parent=43 // pred_check
          %p1025 = pneg %p131
        $region46: #{tpu_custom_call.1} parent=43 // pred_check_branch
          %1027 = sbr.rel (%p1025) target = $region48
        $region47: #{tpu_custom_call.1} parent=43 // pred_region
          %s1028 = sand.u32 %s116, 1
          %s1029 = scalar_lea.sflag [#allocation3], %s1028
          %s1030 = sand.u32 %s116, 1
          %s1031 = smul.addr %s1030, 8
          %s1032 = scalar_lea.vmem [#allocation2], %s1031
          %1033 = dma.done %s1029, 128
        $region48: #{tpu_custom_call.1} parent=43 // pred_fallthru
          _
      $region44: #{tpu_custom_call.1} parent=5 // pred_fallthru
        _
    $region6: #{tpu_custom_call.1} parent=1 // loop_footer
      %s17 = sadd.s32 1, %s13
    $region7: #{tpu_custom_call.1} parent=1 // loop_footer_branch
      %12 = sbr.rel target = $region3
    $region8: #{tpu_custom_call.1} parent=1 // loop_exit
      _
    %1034 = vsyncpa [#allocation3], 1
    %s1035 = scalar_lea.sflag [#allocation3], 1
    %1036 = vsyncpa %s1035, 1

</llo_original>
